<compile_context>
chip_gen: v7x
topology: tpu7x:2x2x1
jax: 0.10.0
libtpu: 0.0.40
codegen_flags: <defaults>
</compile_context>

<pallas_src>
import jax
import jax.numpy as jnp
from jax.experimental import pallas as pl
from jax.experimental.pallas import tpu as pltpu


def _round_up(x, m):
    return (x + m - 1) // m * m


def _sublane_multiple(dtype):
    # dtype-aware sublane tiling minimum: f32 -> 8, bf16 -> 16, int8/fp8 -> 32.
    itemsize = jnp.dtype(dtype).itemsize
    return max(8, 32 // max(itemsize, 1))


def _default_vmem_budget_bytes():
    """~2/3 of physical VMEM (v5e/v6e: 128 MiB -> ~85 MiB, v7x: 64 MiB -> ~42 MiB)."""
    try:
        return int(pltpu.get_tpu_info().vmem_capacity_bytes * 2 // 3)
    except Exception:
        return 40 * 1024 * 1024


# --------------------------------------------------------------------------- #
# Resident (small-vocab) path: one-hot MXU gather, table split into bf16 hi/lo.
# --------------------------------------------------------------------------- #
def _onehot_lookup_kernel(ids_ref, hi_ref, lo_ref, out_ref):
    """ids_ref: (tb, 1) i32 VMEM block; hi/lo: (V, Dp) bf16 VMEM-resident
    (untiled, single-buffered); out_ref: (tb, Dp) block.

    out = onehot(ids) @ hi + onehot(ids) @ lo  -- two native bf16 MXU passes,
    exact row selection (the one-hot is exactly representable in bf16), row
    reconstruction error ~2^-18 relative.  OOB/padded ids select a zero row.
    """
    tb = ids_ref.shape[0]
    vocab = hi_ref.shape[0]
    iota = jax.lax.broadcasted_iota(jnp.int32, (tb, vocab), 1)
    onehot = (iota == ids_ref[...]).astype(jnp.bfloat16)
    hi = jnp.dot(onehot, hi_ref[...], preferred_element_type=jnp.float32)
    lo = jnp.dot(onehot, lo_ref[...], preferred_element_type=jnp.float32)
    out_ref[...] = (hi + lo).astype(out_ref.dtype)


def _resident_token_block(tb_req, n_tok, vocab, d_pad, budget, sub):
    """Largest token block (multiple of `sub`) whose working set fits `budget`,
    shrinking tb before giving up residency; None if even the smallest fails."""
    tb_try = _round_up(min(tb_req, _round_up(max(n_tok, 1), sub)), sub)
    table_bytes = 2 * vocab * d_pad * 2            # hi + lo bf16, single-buffered
    while True:
        ids_bytes = 2 * tb_try * 128 * 4           # (tb,1) i32, lane-padded, double-buffered
        out_bytes = 2 * tb_try * d_pad * 4         # out blocks, double-buffered
        onehot_bytes = tb_try * vocab * 8          # bf16 one-hot + i32 iota/compare temps
        acc_bytes = 2 * tb_try * d_pad * 4         # two f32 dot results
        if table_bytes + ids_bytes + out_bytes + onehot_bytes + acc_bytes <= budget:
            return tb_try
        if tb_try <= sub:
            return None
        tb_try = max(sub, _round_up(tb_try // 2, sub))


# --------------------------------------------------------------------------- #
# Gather (large-vocab) path: ids in SMEM via scalar prefetch, table in HBM,
# per-row async DMA straight into the pipelined output block.
# --------------------------------------------------------------------------- #
_GATHER_INFLIGHT = 16  # bounded number of row DMAs in flight


def _dma_gather_kernel(ids_ref, table_ref, out_ref, sem):
    """ids_ref: (n_pad,) i32 SMEM (scalar-prefetched); table_ref: (V, D) HBM
    (pl.ANY); out_ref: (tb, D) VMEM output block; sem: single DMA semaphore."""
    blk = pl.program_id(0)
    tb = out_ref.shape[0]
    base = blk * tb
    window = min(_GATHER_INFLIGHT, tb)

    def issue(r):
        row = ids_ref[base + r]
        pltpu.make_async_copy(
            table_ref.at[pl.ds(row, 1)], out_ref.at[pl.ds(r, 1)], sem
        ).start()

    def drain(r):
        # Size-only descriptor: every row copy is one (1, D) slice of `table`.
        pltpu.make_async_copy(
            table_ref.at[pl.ds(0, 1)], out_ref.at[pl.ds(r, 1)], sem
        ).wait()

    @pl.loop(0, window)
    def _prime(r):
        issue(r)

    @pl.loop(0, tb)
    def _steady(r):
        drain(r)

        @pl.when(r + window < tb)
        def _():
            issue(r + window)


# --------------------------------------------------------------------------- #
# Wrapper
# --------------------------------------------------------------------------- #
def embedding_lookup(table, data, *, tb=512, method=None, vmem_budget_bytes=None):
    """Pallas embedding lookup: returns table[data] with shape data.shape + (D,).

    method: None (auto: VMEM-budget driven), "resident", or "gather".
    """
    vocab, dim = table.shape
    itemsize = jnp.dtype(table.dtype).itemsize
    sub = _sublane_multiple(table.dtype)

    flat_ids = data.reshape(-1).astype(jnp.int32)
    n_tok = flat_ids.shape[0]

    budget = (
        vmem_budget_bytes if vmem_budget_bytes is not None else _default_vmem_budget_bytes()
    )
    d_pad = _round_up(dim, 128)

    tb_res = _resident_token_block(tb, n_tok, vocab, d_pad, budget, sub)
    if method is None:
        method = "resident" if tb_res is not None else "gather"

    if method == "resident":
        tb_eff = tb_res if tb_res is not None else _round_up(
            min(tb, _round_up(max(n_tok, 1), sub)), sub
        )
        n_pad = _round_up(max(n_tok, 1), tb_eff)
        ids = jnp.pad(flat_ids, (0, n_pad - n_tok)).reshape(n_pad, 1)
        n_blocks = n_pad // tb_eff

        # One cheap elementwise pass per call: split the f32 table into hi/lo
        # bf16 halves (exact bf16 MXU row reconstruction to ~2^-18 relative).
        tab32 = table.astype(jnp.float32)
        hi = tab32.astype(jnp.bfloat16)
        lo = (tab32 - hi.astype(jnp.float32)).astype(jnp.bfloat16)
        if d_pad != dim:
            col_pad = ((0, 0), (0, d_pad - dim))
            hi = jnp.pad(hi, col_pad)
            lo = jnp.pad(lo, col_pad)

        cost = pl.CostEstimate(
            flops=4 * n_pad * vocab * d_pad,  # two bf16 passes
            transcendentals=0,
            bytes_accessed=2 * vocab * d_pad * 2 + n_pad * 4 + n_pad * d_pad * itemsize,
        )
        flat_out = pl.pallas_call(
            _onehot_lookup_kernel,
            out_shape=jax.ShapeDtypeStruct((n_pad, d_pad), table.dtype),
            grid=(n_blocks,),
            in_specs=[
                pl.BlockSpec((tb_eff, 1), lambda i: (i, 0)),
                pl.BlockSpec(memory_space=pltpu.MemorySpace.VMEM),  # hi: untiled, resident
                pl.BlockSpec(memory_space=pltpu.MemorySpace.VMEM),  # lo: untiled, resident
            ],
            out_specs=pl.BlockSpec((tb_eff, d_pad), lambda i: (i, 0)),
            compiler_params=pltpu.CompilerParams(
                dimension_semantics=("parallel",),
                vmem_limit_bytes=int(budget),
            ),
            cost_estimate=cost,
        )(ids, hi, lo)
        return flat_out[:n_tok, :dim].reshape(data.shape + (dim,))

    if method == "gather":
        tb_eff = _round_up(min(tb, _round_up(max(n_tok, 1), sub)), sub)
        n_pad = _round_up(max(n_tok, 1), tb_eff)
        ids = jnp.pad(flat_ids, (0, n_pad - n_tok))  # (n_pad,) for SMEM scalar prefetch
        n_blocks = n_pad // tb_eff

        flat_out = pl.pallas_call(
            _dma_gather_kernel,
            out_shape=jax.ShapeDtypeStruct((n_pad, dim), table.dtype),
            grid_spec=pltpu.PrefetchScalarGridSpec(
                num_scalar_prefetch=1,
                grid=(n_blocks,),
                in_specs=[pl.BlockSpec(memory_space=pl.ANY)],  # table: raw HBM ref
                out_specs=pl.BlockSpec((tb_eff, dim), lambda i, ids_sref: (i, 0)),
                scratch_shapes=[pltpu.SemaphoreType.DMA],
            ),
            compiler_params=pltpu.CompilerParams(
                dimension_semantics=("parallel",),
                vmem_limit_bytes=int(budget),
            ),
        )(ids, table)
        return flat_out[:n_tok].reshape(data.shape + (dim,))

    raise ValueError(f"unknown method: {method!r}")


class Word2VecPallas:
    """JAX/Pallas port of the PyTorch Word2Vec module (forward / forward_o)."""

    def __init__(self, vocab_size, dim, normalize=False, key=None):
        if key is None:
            key = jax.random.PRNGKey(0)
        k_in, k_out = jax.random.split(key)
        # torch.nn.Embedding default init: N(0, 1)
        self.ivectors = jax.random.normal(k_in, (vocab_size, dim), dtype=jnp.float32)
        self.ovectors = jax.random.normal(k_out, (vocab_size, dim), dtype=jnp.float32)
        self.scale = jnp.array([1.0], dtype=jnp.float32)  # non-trainable; unused in fwd
        self.normalize = normalize
        self.training = True
        # TODO(synk): when forward and forward_o are needed for the SAME ids, a
        # single lookup over concat([ivectors, ovectors], axis=1) would fill the
        # 256-wide MXU on v6e/v7x and amortize the one-hot build across both.

    def forward(self, data):
        x = embedding_lookup(self.ivectors, data)
        if self.training is False:
            # Mirrors the PyTorch eval-mode .detach().numpy().
            return jax.device_get(x)
        return x

    def forward_o(self, data):
        x = embedding_lookup(self.ovectors, data)
        if self.training is False:
            return jax.device_get(x)
        return x


if __name__ == "__main__":
    VOCAB = 64
    DIM = 128
    B, S = 2, 8  # 16 tokens

    key = jax.random.PRNGKey(0)
    k_model, k_data = jax.random.split(key)

    model = Word2VecPallas(VOCAB, DIM, key=k_model)
    data = jax.random.randint(k_data, (B, S), 0, VOCAB, dtype=jnp.int32)

    ref = model.ivectors[data]
    ref_o = model.ovectors[data]

    # Resident (MXU one-hot) path.
    out = jax.block_until_ready(model.forward(data))
    out_o = jax.block_until_ready(model.forward_o(data))
    assert out.shape == (B, S, DIM) and out.dtype == jnp.float32
    assert jnp.allclose(out, ref, atol=1e-4, rtol=1e-4)
    assert jnp.allclose(out_o, ref_o, atol=1e-4, rtol=1e-4)

    # Large-vocab path: scalar-prefetch + per-row DMA gather from HBM (exact).
    out_gather = jax.block_until_ready(
        embedding_lookup(model.ivectors, data, method="gather")
    )
    assert out_gather.shape == (B, S, DIM)
    assert jnp.allclose(out_gather, ref, atol=1e-6, rtol=1e-6)

    print("KERNEL_OK")
</pallas_src>

<mosaic_0001>
module attributes {stable_mosaic.version = 11 : i64} {
  func.func @_onehot_lookup_kernel(%arg0: i32, %arg1: memref<16x1xi32, #tpu.memory_space<vmem>>, %arg2: memref<64x128xbf16, #tpu.memory_space<vmem>>, %arg3: memref<64x128xbf16, #tpu.memory_space<vmem>>, %arg4: memref<16x128xf32, #tpu.memory_space<vmem>>) attributes {dimension_semantics = [#tpu.dimension_semantics<parallel>], iteration_bounds = array<i64: 1>, scalar_prefetch = 0 : i64, scratch_operands = 0 : i64, tpu.core_type = #tpu.core_type<tc>, window_params = [{transform_indices = @transform_0, window_bounds = array<i64: 16, 1>}, {pipeline_mode = #tpu.pipeline_mode<synchronous>, transform_indices = @transform_1, window_bounds = array<i64: 64, 128>}, {pipeline_mode = #tpu.pipeline_mode<synchronous>, transform_indices = @transform_2, window_bounds = array<i64: 64, 128>}, {transform_indices = @transform_3, window_bounds = array<i64: 16, 128>}]} {
    %0 = tpu.iota {dimensions = array<i32: 1>} : vector<16x64xi32>
    %c0 = arith.constant 0 : index
    %c0_0 = arith.constant 0 : index
    %1 = vector.load %arg1[%c0, %c0_0] : memref<16x1xi32, #tpu.memory_space<vmem>>, vector<16x1xi32>
    %2 = vector.broadcast %1 : vector<16x1xi32> to vector<16x64xi32>
    %3 = arith.cmpi eq, %0, %2 : vector<16x64xi32>
    %4 = arith.extui %3 : vector<16x64xi1> to vector<16x64xi32>
    %5 = arith.sitofp %4 : vector<16x64xi32> to vector<16x64xf32>
    %6 = arith.truncf %5 : vector<16x64xf32> to vector<16x64xbf16>
    %c0_1 = arith.constant 0 : index
    %c0_2 = arith.constant 0 : index
    %7 = vector.load %arg2[%c0_1, %c0_2] : memref<64x128xbf16, #tpu.memory_space<vmem>>, vector<64x128xbf16>
    %cst = arith.constant dense<0.000000e+00> : vector<16x128xf32>
    %8 = tpu.matmul %6, %7, %cst {dimension_numbers = #tpu.dot_dimension_numbers<[1], [0], [0], [1], [0, 0, 1, 1], [], []>} : vector<16x64xbf16>, vector<64x128xbf16>, vector<16x128xf32> -> vector<16x128xf32>
    %c0_3 = arith.constant 0 : index
    %c0_4 = arith.constant 0 : index
    %9 = vector.load %arg3[%c0_3, %c0_4] : memref<64x128xbf16, #tpu.memory_space<vmem>>, vector<64x128xbf16>
    %cst_5 = arith.constant dense<0.000000e+00> : vector<16x128xf32>
    %10 = tpu.matmul %6, %9, %cst_5 {dimension_numbers = #tpu.dot_dimension_numbers<[1], [0], [0], [1], [0, 0, 1, 1], [], []>} : vector<16x64xbf16>, vector<64x128xbf16>, vector<16x128xf32> -> vector<16x128xf32>
    %11 = arith.addf %8, %10 : vector<16x128xf32>
    %c0_6 = arith.constant 0 : index
    %c0_7 = arith.constant 0 : index
    %12 = vector.load %arg4[%c0_6, %c0_7] : memref<16x128xf32, #tpu.memory_space<vmem>>, vector<16x128xf32>
    tpu.vector_store %arg4[%c0_6, %c0_7], %11 {strides = array<i32>} : memref<16x128xf32, #tpu.memory_space<vmem>>, vector<16x128xf32>,
    return
  }
  func.func @transform_0(%arg0: i32) -> (i32, i32) {
    %c0_i32 = arith.constant 0 : i32
    %c0_i32_0 = arith.constant 0 : i32
    return %arg0, %c0_i32 : i32, i32
  }
  func.func @transform_1(%arg0: i32) -> (i32, i32) {
    %c0_i32 = arith.constant 0 : i32
    %c0_i32_0 = arith.constant 0 : i32
    %c0_i32_1 = arith.constant 0 : i32
    return %c0_i32, %c0_i32_0 : i32, i32
  }
  func.func @transform_2(%arg0: i32) -> (i32, i32) {
    %c0_i32 = arith.constant 0 : i32
    %c0_i32_0 = arith.constant 0 : i32
    %c0_i32_1 = arith.constant 0 : i32
    return %c0_i32, %c0_i32_0 : i32, i32
  }
  func.func @transform_3(%arg0: i32) -> (i32, i32) {
    %c0_i32 = arith.constant 0 : i32
    %c0_i32_0 = arith.constant 0 : i32
    return %arg0, %c0_i32 : i32, i32
  }
}

</mosaic_0001>

<llo_original>
// kernel: tpu_custom_call.1
$region0: #{tpu_custom_call.1}
  #allocation0 [shape = 'u32[]', space=smem, size = 0x4, offset = 0x4, fixed_abs, tag = 'smem constant byte address 0x4 - core index']
  #allocation1 [shape = 'u32[144,128]{1,0:T(1,128)}', space=vmem, size = 0x12000, scoped, tag = 'internal scratch']
  %s0 = inlined_call_operand.vmem [shape: s32[16,1], index: 0, kind: input, shape index: {}]
  %s1 = inlined_call_operand.hbm [shape: bf16[64,128], index: 1, kind: input, shape index: {}]
  %s2 = inlined_call_operand.hbm [shape: bf16[64,128], index: 2, kind: input, shape index: {}]
  %s3 = inlined_call_operand.hbm [shape: f32[16,128], index: 3, kind: output, shape index: {}]
  %s4 = sld [smem:[#allocation0]]
  $region30: #{tpu_custom_call.1} parent=0
    _
  %s6 = ssub.s32 1, %s4
  %s7 = scalar_select 0, %s6, %s4
  $region1: #{tpu_custom_call.1} parent=0
    #allocation2 [shape = 'u8[16384]{0}', space=vmem, size = 0x4000, scoped, tag = 'input window, operand 1, single buffered']
    #allocation3 [shape = 's32[1]{0}', space=sflag, size = 0x4, scoped, tag = 'scoped memory for tpu_custom_call.1']
    #allocation4 [shape = 's32[1]{0}', space=sflag, size = 0x4, scoped, tag = 'scoped memory for tpu_custom_call.1']
    #allocation5 [shape = 'u8[16384]{0}', space=vmem, size = 0x4000, scoped, tag = 'input window, operand 2, single buffered']
    #allocation6 [shape = 's32[1]{0}', space=sflag, size = 0x4, scoped, tag = 'scoped memory for tpu_custom_call.1']
    #allocation7 [shape = 'u8[8192]{0}', space=vmem, size = 0x2000, scoped, tag = 'output window, operand 0, single buffered']
    %8 = vsyncpa [#allocation3], 0
    %9 = vsyncpa [#allocation6], 0
    %10 = vsyncpa [#allocation4], 0
    // Predicated region
    $region2: #{tpu_custom_call.1} parent=1 // pred_check
      _
    $region3: #{tpu_custom_call.1} parent=1 // pred_check_branch
      %12 = sbr.rel (0) target = $region5
    $region4: #{tpu_custom_call.1} parent=1 // pred_region
      _
    $region5: #{tpu_custom_call.1} parent=1 // pred_fallthru
      _
    // Predicated region
    $region6: #{tpu_custom_call.1} parent=1 // pred_check
      _
    $region7: #{tpu_custom_call.1} parent=1 // pred_check_branch
      %14 = sbr.rel (0) target = $region9
    $region8: #{tpu_custom_call.1} parent=1 // pred_region
      %s16 = ssub.s32 512, 512
      %17 = vsyncadd [#allocation3], %s16
      %s18 = sshll.u32 [#allocation2], 4
      %s19 = int_to_ptr.vmem [resolvable:$true] %s18
      %24 = dma.hbm_to_vmem [thread:$0]  %s1, 512, %s19, [#allocation3], 64, 64, 4
    $region9: #{tpu_custom_call.1} parent=1 // pred_fallthru
      _
    // Predicated region
    $region10: #{tpu_custom_call.1} parent=1 // pred_check
      _
    $region11: #{tpu_custom_call.1} parent=1 // pred_check_branch
      %26 = sbr.rel (0) target = $region13
    $region12: #{tpu_custom_call.1} parent=1 // pred_region
      %s28 = ssub.s32 512, 512
      %29 = vsyncadd [#allocation6], %s28
      %s30 = sshll.u32 [#allocation5], 4
      %s31 = int_to_ptr.vmem [resolvable:$true] %s30
      %36 = dma.hbm_to_vmem [thread:$0]  %s2, 512, %s31, [#allocation6], 64, 64, 4
    $region13: #{tpu_custom_call.1} parent=1 // pred_fallthru
      _
    // Predicated region
    $region14: #{tpu_custom_call.1} parent=1 // pred_check
      _
    $region15: #{tpu_custom_call.1} parent=1 // pred_check_branch
      %38 = sbr.rel (0) target = $region17
    $region16: #{tpu_custom_call.1} parent=1 // pred_region
      %39 = dma.done [#allocation3], 512
    $region17: #{tpu_custom_call.1} parent=1 // pred_fallthru
      _
    // Predicated region
    $region18: #{tpu_custom_call.1} parent=1 // pred_check
      _
    $region19: #{tpu_custom_call.1} parent=1 // pred_check_branch
      %41 = sbr.rel (0) target = $region21
    $region20: #{tpu_custom_call.1} parent=1 // pred_region
      %42 = dma.done [#allocation6], 512
    $region21: #{tpu_custom_call.1} parent=1 // pred_fallthru
      _
    %v44 = vlaneseq
    %v45 = vand.u32 %v44, 127
    %v46 = vld [vmem:[%s0] sm:$0xff]
    %v47 = vld [vmem:[%s0 + $0x8] sm:$0xff]
    %48 = vset.pattern.permute.xlu0 0
    %49 = vperm.xlu0 %48, %v46
    %v50 = vpop.permute.xlu0 %49
    %51 = vset.pattern.permute.xlu0 0
    %52 = vperm.xlu0 %51, %v47
    %v53 = vpop.permute.xlu0 %52
    %vm54 = vcmp.eq.s32.totalorder %v45, %v50
    %vm55 = vcmp.eq.s32.totalorder %v45, %v53
    %v56 = vsel %vm54, 1, 0
    %v57 = vsel %vm55, 1, 0
    %v58 = vcvt.s32.f32 %v56
    %v59 = vcvt.s32.f32 %v57
    %v60 = vpack.c.bf16 %v59, %v58
    %v61 = vld [vmem:[#allocation2] sm:$0xf]
    %v62 = vld [vmem:[#allocation2 + $0x4] sm:$0xf]
    %v63 = vld [vmem:[#allocation2 + $0x8] sm:$0xf]
    %v64 = vld [vmem:[#allocation2 + $0xc] sm:$0xf]
    %v65 = vld [vmem:[#allocation2 + $0x10] sm:$0xf]
    %v66 = vld [vmem:[#allocation2 + $0x14] sm:$0xf]
    %v67 = vld [vmem:[#allocation2 + $0x18] sm:$0xf]
    %v68 = vld [vmem:[#allocation2 + $0x1c] sm:$0xf]
    %v69 = vld [vmem:[#allocation5] sm:$0xf]
    %v70 = vld [vmem:[#allocation5 + $0x4] sm:$0xf]
    %v71 = vld [vmem:[#allocation5 + $0x8] sm:$0xf]
    %v72 = vld [vmem:[#allocation5 + $0xc] sm:$0xf]
    %v73 = vld [vmem:[#allocation5 + $0x10] sm:$0xf]
    %v74 = vld [vmem:[#allocation5 + $0x14] sm:$0xf]
    %v75 = vld [vmem:[#allocation5 + $0x18] sm:$0xf]
    %v76 = vld [vmem:[#allocation5 + $0x1c] sm:$0xf]
    %v85 = vunpack.c.l.b16 %v69
    %v86 = vunpack.c.l.b16 %v70
    %v87 = vunpack.c.l.b16 %v71
    %v88 = vunpack.c.l.b16 %v72
    %v89 = vunpack.c.l.b16 %v73
    %v90 = vunpack.c.l.b16 %v74
    %v91 = vunpack.c.l.b16 %v75
    %v92 = vunpack.c.l.b16 %v76
    %v93 = vpack.c.b16 %v86, %v85
    %v94 = vpack.c.b16 %v88, %v87
    %v95 = vpack.c.b16 %v90, %v89
    %v96 = vpack.c.b16 %v92, %v91
    %vm101 = vcmask 523264
    %v103 = vsel %vm101, %v60, 0
    %105 = vmatprep.subr.bf16.mxu0 0
    %106 = vmatpush1.bf16.msra.mxu0 %v93
    %107 = vmatprep.subr.bf16.mxu0 0
    %108 = vmatpush1.bf16.msra.mxu0 %v94
    %109 = vmatprep.subr.bf16.mxu0 0
    %110 = vmatpush1.bf16.msra.mxu0 %v95
    %111 = vmatprep.subr.bf16.mxu0 0
    %112 = vmatpush1.bf16.msra.mxu0 %v96
    %113 = vmatprep.subr.bf16.mxu0 0
    %114 = vmatpush1.bf16.msra.mxu0 0
    %115 = vmatprep.subr.bf16.mxu0 0
    %116 = vmatpush1.bf16.msra.mxu0 0
    %117 = vmatprep.subr.bf16.mxu0 0
    %118 = vmatpush1.bf16.msra.mxu0 0
    %119 = vmatprep.subr.bf16.mxu0 0
    %120 = vmatpush1.bf16.msra.mxu0 0
    %121 = vmatprep.subr.bf16.mxu0 0
    %122 = vmatpush1.bf16.msra.mxu0 0
    %123 = vmatprep.subr.bf16.mxu0 0
    %124 = vmatpush1.bf16.msra.mxu0 0
    %125 = vmatprep.subr.bf16.mxu0 0
    %126 = vmatpush1.bf16.msra.mxu0 0
    %127 = vmatprep.subr.bf16.mxu0 0
    %128 = vmatpush1.bf16.msra.mxu0 0
    %129 = vmatprep.subr.bf16.mxu0 0
    %130 = vmatpush1.bf16.msra.mxu0 0
    %131 = vmatprep.subr.bf16.mxu0 0
    %132 = vmatpush1.bf16.msra.mxu0 0
    %133 = vmatprep.subr.bf16.mxu0 0
    %134 = vmatpush1.bf16.msra.mxu0 0
    %135 = vmatprep.subr.bf16.mxu0 0
    %136 = vmatpush1.bf16.msra.mxu0 0
    %137 = vmatprep.mubr.bf16.mxu0 0
    %138 = vmatmul.mubr.bf16.gmra.mrb[0].mxu0 %v103
    %v139 = vpop.f32.mrb[0].mxu0
    %v140 = vadd.f32 0.0, %v139
    %v141 = vpop.f32.mrb[0].mxu0
    %v142 = vpop.f32.mrb[0].mxu0
    %v143 = vadd.f32 0.0, %v142
    %v144 = vpop.f32.mrb[0].mxu0
    %145 = vdwg.mxu0
    %v154 = vunpack.c.l.b16 %v61
    %v155 = vunpack.c.l.b16 %v62
    %v156 = vunpack.c.l.b16 %v63
    %v157 = vunpack.c.l.b16 %v64
    %v158 = vunpack.c.l.b16 %v65
    %v159 = vunpack.c.l.b16 %v66
    %v160 = vunpack.c.l.b16 %v67
    %v161 = vunpack.c.l.b16 %v68
    %v162 = vpack.c.b16 %v155, %v154
    %v163 = vpack.c.b16 %v157, %v156
    %v164 = vpack.c.b16 %v159, %v158
    %v165 = vpack.c.b16 %v161, %v160
    %170 = vmatprep.subr.bf16.mxu0 0
    %171 = vmatpush1.bf16.msra.mxu0 %v162
    %172 = vmatprep.subr.bf16.mxu0 0
    %173 = vmatpush1.bf16.msra.mxu0 %v163
    %174 = vmatprep.subr.bf16.mxu0 0
    %175 = vmatpush1.bf16.msra.mxu0 %v164
    %176 = vmatprep.subr.bf16.mxu0 0
    %177 = vmatpush1.bf16.msra.mxu0 %v165
    %178 = vmatprep.subr.bf16.mxu0 0
    %179 = vmatpush1.bf16.msra.mxu0 0
    %180 = vmatprep.subr.bf16.mxu0 0
    %181 = vmatpush1.bf16.msra.mxu0 0
    %182 = vmatprep.subr.bf16.mxu0 0
    %183 = vmatpush1.bf16.msra.mxu0 0
    %184 = vmatprep.subr.bf16.mxu0 0
    %185 = vmatpush1.bf16.msra.mxu0 0
    %186 = vmatprep.subr.bf16.mxu0 0
    %187 = vmatpush1.bf16.msra.mxu0 0
    %188 = vmatprep.subr.bf16.mxu0 0
    %189 = vmatpush1.bf16.msra.mxu0 0
    %190 = vmatprep.subr.bf16.mxu0 0
    %191 = vmatpush1.bf16.msra.mxu0 0
    %192 = vmatprep.subr.bf16.mxu0 0
    %193 = vmatpush1.bf16.msra.mxu0 0
    %194 = vmatprep.subr.bf16.mxu0 0
    %195 = vmatpush1.bf16.msra.mxu0 0
    %196 = vmatprep.subr.bf16.mxu0 0
    %197 = vmatpush1.bf16.msra.mxu0 0
    %198 = vmatprep.subr.bf16.mxu0 0
    %199 = vmatpush1.bf16.msra.mxu0 0
    %200 = vmatprep.subr.bf16.mxu0 0
    %201 = vmatpush1.bf16.msra.mxu0 0
    %202 = vmatprep.mubr.bf16.mxu0 0
    %203 = vmatmul.mubr.bf16.gmra.mrb[0].mxu0 %v103
    %v204 = vpop.f32.mrb[0].mxu0
    %v205 = vadd.f32 %v140, %v204
    %v206 = vpop.f32.mrb[0].mxu0
    %v207 = vpop.f32.mrb[0].mxu0
    %v208 = vadd.f32 %v143, %v207
    %v209 = vpop.f32.mrb[0].mxu0
    %210 = vdwg.mxu0
    %211 = vst [vmem:[#allocation7] sm:$0xff] %v205
    %212 = vst [vmem:[#allocation7 + $0x8] sm:$0xff] %v208
    // Predicated region
    $region22: #{tpu_custom_call.1} parent=1 // pred_check
      _
    $region23: #{tpu_custom_call.1} parent=1 // pred_check_branch
      %214 = sbr.rel (0) target = $region25
    $region24: #{tpu_custom_call.1} parent=1 // pred_region
      %s216 = ssub.s32 256, 256
      %217 = vsyncadd [#allocation4], %s216
      %s218 = sshll.u32 [#allocation7], 4
      %s219 = int_to_ptr.vmem [resolvable:$true] %s218
      %224 = dma.vmem_to_hbm [thread:$0]  %s219, 256, %s3, [#allocation4], 128, 128, 8
    $region25: #{tpu_custom_call.1} parent=1 // pred_fallthru
      _
    // Predicated region
    $region26: #{tpu_custom_call.1} parent=1 // pred_check
      _
    $region27: #{tpu_custom_call.1} parent=1 // pred_check_branch
      %226 = sbr.rel (0) target = $region29
    $region28: #{tpu_custom_call.1} parent=1 // pred_region
      %227 = dma.done [#allocation4], 256
    $region29: #{tpu_custom_call.1} parent=1 // pred_fallthru
      _
    %228 = vsyncpa [#allocation3], 1
    %229 = vsyncpa [#allocation6], 1
    %230 = vsyncpa [#allocation4], 1

</llo_original>
